<compile_context>
chip_gen: v7x
topology: tpu7x:2x2x1
jax: 0.10.0
libtpu: 0.0.40
codegen_flags: <defaults>
</compile_context>

<pallas_src>
import functools

import jax
import jax.numpy as jnp
import numpy as np
from jax.experimental import pallas as pl
from jax.experimental.pallas import tpu as pltpu


def _adaptive_bounds(in_size, out_size):
    """PyTorch adaptive pooling window [start, end) per output index."""
    return [
        ((i * in_size) // out_size, -((-(i + 1) * in_size) // out_size))
        for i in range(out_size)
    ]


def _round_up(x, m):
    return (x + m - 1) // m * m


def _pick_block_rows(nc, row_bytes, target_bytes=2 << 20):
    """Rows (fused N*C) per grid step.

    Multiple of 8 (sublane), ~target_bytes of input per block (fits comfortably
    in the scoped-VMEM defaults on v5e/v6e/v7x with double buffering), and at
    least 2 grid steps when there is enough work (v7x has 2 TensorCores).
    """
    nc8 = _round_up(nc, 8)
    b = max(8, (target_bytes // max(row_bytes, 1)) // 8 * 8)
    b = min(b, nc8)
    if b == nc8 and nc8 >= 16:
        b = _round_up(nc8 // 2, 8)
    return b


def _pool_kernel(x_ref, p_ref, inv_ref, o_ref):
    # x_ref  : (B, DHW)      float32  -- one block of fused N*C rows
    # p_ref  : (DHW, Fo_pad) bfloat16 -- 0/1 pooling matrix (resident across steps)
    # inv_ref: (1, Fo_pad)   float32  -- reciprocal window counts (0 in padding)
    # o_ref  : (B, Fo_pad)   float32
    x = x_ref[...]
    # Emulate torch .to(torch.int8): truncate toward zero, wrap mod 256.
    # int8 values are exactly representable in bf16, so the bf16 cast is exact.
    xq = x.astype(jnp.int32).astype(jnp.int8).astype(jnp.float32)
    xb = xq.astype(jnp.bfloat16)
    # One MXU matmul per block: exact integer sums in the f32 accumulator.
    acc = jnp.dot(xb, p_ref[...], preferred_element_type=jnp.float32)
    o_ref[...] = acc * inv_ref[...]


@functools.partial(jax.jit, static_argnames=("output_size",))
def adaptive_avg_pool3d_int8(x, output_size):
    N, C, D, H, W = x.shape
    Do, Ho, Wo = output_size
    NC = N * C
    DHW = D * H * W
    Fo = Do * Ho * Wo
    Fo_pad = _round_up(Fo, 128)          # lane-dense output stores

    d_bounds = _adaptive_bounds(D, Do)
    h_bounds = _adaptive_bounds(H, Ho)
    w_bounds = _adaptive_bounds(W, Wo)

    # Static 0/1 pooling matrix (flattened-spatial -> flattened-output) and
    # reciprocal window counts, built at trace time with numpy.  Padded output
    # columns are all-zero, so the corresponding outputs are exactly 0.
    pool = np.zeros((DHW, Fo_pad), np.float32)
    inv = np.zeros((1, Fo_pad), np.float32)
    for od, (d0, d1) in enumerate(d_bounds):
        for oh, (h0, h1) in enumerate(h_bounds):
            for ow, (w0, w1) in enumerate(w_bounds):
                o = (od * Ho + oh) * Wo + ow
                inv[0, o] = 1.0 / float((d1 - d0) * (h1 - h0) * (w1 - w0))
                for d in range(d0, d1):
                    for h in range(h0, h1):
                        base = (d * H + h) * W
                        pool[base + w0:base + w1, o] = 1.0

    # Flatten to (NC, DHW): contiguous reshape, contiguous last dim.
    xf = x.reshape(NC, DHW)

    b = _pick_block_rows(NC, DHW * 4)
    nc_pad = _round_up(NC, b)
    if nc_pad != NC:
        xf = jnp.pad(xf, ((0, nc_pad - NC), (0, 0)))
    grid = nc_pad // b

    out = pl.pallas_call(
        _pool_kernel,
        out_shape=jax.ShapeDtypeStruct((nc_pad, Fo_pad), jnp.float32),
        grid_spec=pltpu.PrefetchScalarGridSpec(
            num_scalar_prefetch=0,
            grid=(grid,),
            in_specs=[
                pl.BlockSpec((b, DHW), lambda i: (i, 0)),
                pl.BlockSpec((DHW, Fo_pad), lambda i: (0, 0)),
                pl.BlockSpec((1, Fo_pad), lambda i: (0, 0)),
            ],
            out_specs=pl.BlockSpec((b, Fo_pad), lambda i: (i, 0)),
        ),
        compiler_params=pltpu.CompilerParams(
            dimension_semantics=("parallel",)),
    )(xf, jnp.asarray(pool, dtype=jnp.bfloat16), jnp.asarray(inv))

    return out[:NC, :Fo].reshape(N, C, Do, Ho, Wo)


def _reference(x, output_size):
    """Pure numpy reference of the same semantics (f64 accumulation)."""
    N, C, D, H, W = x.shape
    Do, Ho, Wo = output_size
    xq = np.asarray(x).astype(np.int32).astype(np.int8).astype(np.float64)
    out = np.zeros((N, C, Do, Ho, Wo), np.float64)
    for od, (d0, d1) in enumerate(_adaptive_bounds(D, Do)):
        for oh, (h0, h1) in enumerate(_adaptive_bounds(H, Ho)):
            for ow, (w0, w1) in enumerate(_adaptive_bounds(W, Wo)):
                out[:, :, od, oh, ow] = xq[:, :, d0:d1, h0:h1, w0:w1].mean(
                    axis=(2, 3, 4))
    return out.astype(np.float32)


if __name__ == "__main__":
    key = jax.random.PRNGKey(0)
    N, C, D, H, W = 2, 128, 8, 6, 10
    output_size = (3, 4, 5)   # uneven / overlapping adaptive windows for D and H

    x = jax.random.uniform(
        key, (N, C, D, H, W), minval=-100.0, maxval=100.0, dtype=jnp.float32)

    y = adaptive_avg_pool3d_int8(x, output_size)
    y = jax.block_until_ready(y)

    y_ref = _reference(x, output_size)
    np.testing.assert_allclose(np.asarray(y), y_ref, rtol=1e-5, atol=1e-5)

    print("KERNEL_OK")
</pallas_src>

<mosaic_0001>
module attributes {stable_mosaic.version = 11 : i64} {
  func.func @_pool_kernel(%arg0: i32, %arg1: memref<128x480xf32, #tpu.memory_space<vmem>>, %arg2: memref<480x128xbf16, #tpu.memory_space<vmem>>, %arg3: memref<1x128xf32, #tpu.memory_space<vmem>>, %arg4: memref<128x128xf32, #tpu.memory_space<vmem>>) attributes {dimension_semantics = [#tpu.dimension_semantics<parallel>], iteration_bounds = array<i64: 2>, scalar_prefetch = 0 : i64, scratch_operands = 0 : i64, tpu.core_type = #tpu.core_type<tc>, window_params = [{transform_indices = @transform_0, window_bounds = array<i64: 128, 480>}, {pipeline_mode = #tpu.pipeline_mode<synchronous>, transform_indices = @transform_1, window_bounds = array<i64: 480, 128>}, {pipeline_mode = #tpu.pipeline_mode<synchronous>, transform_indices = @transform_2, window_bounds = array<i64: 1, 128>}, {transform_indices = @transform_3, window_bounds = array<i64: 128, 128>}]} {
    %c0 = arith.constant 0 : index
    %c0_0 = arith.constant 0 : index
    %0 = vector.load %arg1[%c0, %c0_0] : memref<128x480xf32, #tpu.memory_space<vmem>>, vector<128x480xf32>
    %1 = arith.fptosi %0 : vector<128x480xf32> to vector<128x480xi32>
    %2 = arith.trunci %1 : vector<128x480xi32> to vector<128x480xi8>
    %3 = arith.sitofp %2 : vector<128x480xi8> to vector<128x480xf32>
    %4 = arith.truncf %3 : vector<128x480xf32> to vector<128x480xbf16>
    %c0_1 = arith.constant 0 : index
    %c0_2 = arith.constant 0 : index
    %5 = vector.load %arg2[%c0_1, %c0_2] : memref<480x128xbf16, #tpu.memory_space<vmem>>, vector<480x128xbf16>
    %cst = arith.constant dense<0.000000e+00> : vector<128x128xf32>
    %6 = tpu.matmul %4, %5, %cst {dimension_numbers = #tpu.dot_dimension_numbers<[1], [0], [0], [1], [0, 0, 1, 1], [], []>} : vector<128x480xbf16>, vector<480x128xbf16>, vector<128x128xf32> -> vector<128x128xf32>
    %c0_3 = arith.constant 0 : index
    %c0_4 = arith.constant 0 : index
    %7 = vector.load %arg3[%c0_3, %c0_4] : memref<1x128xf32, #tpu.memory_space<vmem>>, vector<1x128xf32>
    %8 = vector.broadcast %7 : vector<1x128xf32> to vector<128x128xf32>
    %9 = arith.mulf %6, %8 : vector<128x128xf32>
    %c0_5 = arith.constant 0 : index
    %c0_6 = arith.constant 0 : index
    %10 = vector.load %arg4[%c0_5, %c0_6] : memref<128x128xf32, #tpu.memory_space<vmem>>, vector<128x128xf32>
    tpu.vector_store %arg4[%c0_5, %c0_6], %9 {strides = array<i32>} : memref<128x128xf32, #tpu.memory_space<vmem>>, vector<128x128xf32>,
    return
  }
  func.func @transform_0(%arg0: i32) -> (i32, i32) {
    %c0_i32 = arith.constant 0 : i32
    %c0_i32_0 = arith.constant 0 : i32
    return %arg0, %c0_i32 : i32, i32
  }
  func.func @transform_1(%arg0: i32) -> (i32, i32) {
    %c0_i32 = arith.constant 0 : i32
    %c0_i32_0 = arith.constant 0 : i32
    %c0_i32_1 = arith.constant 0 : i32
    return %c0_i32, %c0_i32_0 : i32, i32
  }
  func.func @transform_2(%arg0: i32) -> (i32, i32) {
    %c0_i32 = arith.constant 0 : i32
    %c0_i32_0 = arith.constant 0 : i32
    %c0_i32_1 = arith.constant 0 : i32
    return %c0_i32, %c0_i32_0 : i32, i32
  }
  func.func @transform_3(%arg0: i32) -> (i32, i32) {
    %c0_i32 = arith.constant 0 : i32
    %c0_i32_0 = arith.constant 0 : i32
    return %arg0, %c0_i32 : i32, i32
  }
}

</mosaic_0001>

<llo_original>
// kernel: adaptive_avg_pool3d_int8.1
$region0: #{adaptive_avg_pool3d_int8.1}
  #allocation0 [shape = 'u32[]', space=smem, size = 0x4, offset = 0x4, fixed_abs, tag = 'smem constant byte address 0x4 - core index']
  #allocation1 [shape = 'u32[144,128]{1,0:T(1,128)}', space=vmem, size = 0x12000, scoped, tag = 'internal scratch']
  %s0 = inlined_call_operand.vmem [shape: f32[256,480], index: 0, kind: input, shape index: {}]
  %s1 = inlined_call_operand.vmem [shape: bf16[480,128], index: 1, kind: input, shape index: {}]
  %s2 = inlined_call_operand.vmem [shape: f32[1,128], index: 2, kind: input, shape index: {}]
  %s3 = inlined_call_operand.vmem [shape: f32[256,128], index: 3, kind: output, shape index: {}]
  %s4 = sld [smem:[#allocation0]]
  $region45: #{adaptive_avg_pool3d_int8.1} parent=0
    _
  %s6 = ssub.s32 1, %s4
  %s7 = scalar_select 0, %s6, %s4
  loop: start=0, step=1, limit=4
  $region2: #{adaptive_avg_pool3d_int8.1} parent=0 // loop_pre_header
    _
  $region3: #{adaptive_avg_pool3d_int8.1} parent=0 // loop_header
    %s9 = sphi 0, %s13
    %p10 = scmp.ge.s32.totalorder %s9, 4
    %s19 = sphi 0, %s21
    %s22 = sphi 0, %s19
    %s23 = sphi 0, %s22
    %s39 = sphi 0, %s23
    %s43 = sphi 0, %s43
    %s45 = sphi 0, %s43
    %s46 = sphi 0, %s45
    %s60 = sphi 0, %s46
    %s64 = sphi 0, %s64
    %s66 = sphi 0, %s64
    %s67 = sphi 0, %s66
    %s81 = sphi 0, %s67
    %s87 = sphi 0, %s89
    %s90 = sphi 0, %s87
    %s91 = sphi 0, %s90
    %s107 = sphi 0, %s91
  $region4: #{adaptive_avg_pool3d_int8.1} parent=0 // loop_header_branch
    %12 = sbr.rel (%p10) target = $region8
  $region5: #{adaptive_avg_pool3d_int8.1} parent=0 // loop_body
    %s14 = ssub.s32 %s9, 1
    %s15 = ssub.s32 %s9, 2
    %s16 = sadd.s32 %s9, 1
    %s17 = ssub.s32 %s9, %s16
    %p18 = scmp.eq.s32.totalorder %s17, 0
    %s20 = sadd.s32 %s19, 1
    %s21 = scalar_select %p18, %s19, %s20
    %p24 = pneg %p18
    %p25 = scmp.eq.s32.totalorder %s9, 1
    %p26 = por %p24, %p25
    %p27 = scmp.ne.s32.totalorder %s19, %s22
    %p28 = scmp.eq.s32.totalorder %s9, 0
    %p29 = por %p27, %p28
    %p30 = scmp.ne.s32.totalorder %s19, %s22
    %p31 = scmp.eq.s32.totalorder %s14, 1
    %p32 = por %p30, %p31
    %p33 = scmp.ne.s32.totalorder %s22, %s23
    %p34 = scmp.eq.s32.totalorder %s14, 0
    %p35 = por %p33, %p34
    %p36 = scmp.ne.s32.totalorder %s22, %s23
    %p37 = scmp.eq.s32.totalorder %s15, 1
    %p38 = por %p36, %p37
    %p40 = scmp.ne.s32.totalorder %s23, %s39
    %p41 = scmp.eq.s32.totalorder %s15, 0
    %p42 = por %p40, %p41
    %s44 = sadd.s32 %s43, 1
    %p47 = scmp.eq.s32.totalorder %s9, 1
    %p48 = scmp.ne.s32.totalorder %s43, %s45
    %p49 = scmp.eq.s32.totalorder %s9, 0
    %p50 = por %p48, %p49
    %p51 = scmp.ne.s32.totalorder %s43, %s45
    %p52 = scmp.eq.s32.totalorder %s14, 1
    %p53 = por %p51, %p52
    %p54 = scmp.ne.s32.totalorder %s45, %s46
    %p55 = scmp.eq.s32.totalorder %s14, 0
    %p56 = por %p54, %p55
    %p57 = scmp.ne.s32.totalorder %s45, %s46
    %p58 = scmp.eq.s32.totalorder %s15, 1
    %p59 = por %p57, %p58
    %p61 = scmp.ne.s32.totalorder %s46, %s60
    %p62 = scmp.eq.s32.totalorder %s15, 0
    %p63 = por %p61, %p62
    %s65 = sadd.s32 %s64, 1
    %p68 = scmp.eq.s32.totalorder %s9, 1
    %p69 = scmp.ne.s32.totalorder %s64, %s66
    %p70 = scmp.eq.s32.totalorder %s9, 0
    %p71 = por %p69, %p70
    %p72 = scmp.ne.s32.totalorder %s64, %s66
    %p73 = scmp.eq.s32.totalorder %s14, 1
    %p74 = por %p72, %p73
    %p75 = scmp.ne.s32.totalorder %s66, %s67
    %p76 = scmp.eq.s32.totalorder %s14, 0
    %p77 = por %p75, %p76
    %p78 = scmp.ne.s32.totalorder %s66, %s67
    %p79 = scmp.eq.s32.totalorder %s15, 1
    %p80 = por %p78, %p79
    %p82 = scmp.ne.s32.totalorder %s67, %s81
    %p83 = scmp.eq.s32.totalorder %s15, 0
    %p84 = por %p82, %p83
    %s85 = ssub.s32 %s9, %s16
    %p86 = scmp.eq.s32.totalorder %s85, 0
    %s88 = sadd.s32 %s87, 1
    %s89 = scalar_select %p86, %s87, %s88
    %p92 = pneg %p86
    %p93 = scmp.eq.s32.totalorder %s9, 1
    %p94 = por %p92, %p93
    %p95 = scmp.ne.s32.totalorder %s87, %s90
    %p96 = scmp.eq.s32.totalorder %s9, 0
    %p97 = por %p95, %p96
    %p98 = scmp.ne.s32.totalorder %s87, %s90
    %p99 = scmp.eq.s32.totalorder %s14, 1
    %p100 = por %p98, %p99
    %p101 = scmp.ne.s32.totalorder %s90, %s91
    %p102 = scmp.eq.s32.totalorder %s14, 0
    %p103 = por %p101, %p102
    %p104 = scmp.ne.s32.totalorder %s90, %s91
    %p105 = scmp.eq.s32.totalorder %s15, 1
    %p106 = por %p104, %p105
    %p108 = scmp.ne.s32.totalorder %s91, %s107
    %p109 = scmp.eq.s32.totalorder %s15, 0
    %p110 = por %p108, %p109
    %p111 = scmp.le.s32.totalorder 1, %s9
    %p112 = scmp.lt.s32.totalorder %s9, 3
    %p113 = pnand %p111, %p112
    %p114 = pneg %p113
    // Predicated region
    $region9: #{adaptive_avg_pool3d_int8.1} parent=5 // pred_check
      _
    $region10: #{adaptive_avg_pool3d_int8.1} parent=5 // pred_check_branch
      %116 = sbr.rel (%p113) target = $region12
    $region11: #{adaptive_avg_pool3d_int8.1} parent=5 // pred_region
      %s117 = ssub.s32 %s9, 1
      // Predicated region
      $region13: #{adaptive_avg_pool3d_int8.1} parent=11 // pred_check
        %p118 = pneg %p56
      $region14: #{adaptive_avg_pool3d_int8.1} parent=11 // pred_check_branch
        %120 = sbr.rel (%p118) target = $region16
      $region15: #{adaptive_avg_pool3d_int8.1} parent=11 // pred_region
        _
      $region16: #{adaptive_avg_pool3d_int8.1} parent=11 // pred_fallthru
        _
      // Predicated region
      $region17: #{adaptive_avg_pool3d_int8.1} parent=11 // pred_check
        %p121 = pneg %p77
      $region18: #{adaptive_avg_pool3d_int8.1} parent=11 // pred_check_branch
        %123 = sbr.rel (%p121) target = $region20
      $region19: #{adaptive_avg_pool3d_int8.1} parent=11 // pred_region
        _
      $region20: #{adaptive_avg_pool3d_int8.1} parent=11 // pred_fallthru
        _
    $region12: #{adaptive_avg_pool3d_int8.1} parent=5 // pred_fallthru
      _
    %p124 = scmp.lt.s32.totalorder %s9, 2
    // Predicated region
    $region21: #{adaptive_avg_pool3d_int8.1} parent=5 // pred_check
      %p125 = pneg %p124
    $region22: #{adaptive_avg_pool3d_int8.1} parent=5 // pred_check_branch
      %127 = sbr.rel (%p125) target = $region24
    $region23: #{adaptive_avg_pool3d_int8.1} parent=5 // pred_region
      // Predicated region
      $region25: #{adaptive_avg_pool3d_int8.1} parent=23 // pred_check
        %p128 = pneg %p29
      $region26: #{adaptive_avg_pool3d_int8.1} parent=23 // pred_check_branch
        %130 = sbr.rel (%p128) target = $region28
      $region27: #{adaptive_avg_pool3d_int8.1} parent=23 // pred_region
        %s131 = smul.u32 16, %s9
        %p132 = scmp.lt.s32.totalorder %s131, 31
        %s133 = scalar_select %p132, %s131, 31
        %s134 = smul.addr %s133, 4
        %s135 = smul.addr %s134, 8
        %s136 = scalar_lea.vmem %s0, %s135
        %s137 = smul.u32 16, %s9
      $region28: #{adaptive_avg_pool3d_int8.1} parent=23 // pred_fallthru
        _
    $region24: #{adaptive_avg_pool3d_int8.1} parent=5 // pred_fallthru
      _
    %p138 = scmp.le.s32.totalorder 1, %s9
    %p139 = scmp.lt.s32.totalorder %s9, 3
    %p140 = pnand %p138, %p139
    %p141 = pneg %p140
    // Predicated region
    $region29: #{adaptive_avg_pool3d_int8.1} parent=5 // pred_check
      _
    $region30: #{adaptive_avg_pool3d_int8.1} parent=5 // pred_check_branch
      %143 = sbr.rel (%p140) target = $region32
    $region31: #{adaptive_avg_pool3d_int8.1} parent=5 // pred_region
      %s144 = ssub.s32 %s9, 1
      %s145 = smul.u32 16, %s14
      %p146 = scmp.lt.s32.totalorder %s145, 31
      %s147 = scalar_select %p146, %s145, 31
      %s148 = smul.addr %s147, 4
      %s149 = smul.addr %s148, 8
      %s150 = scalar_lea.vmem %s0, %s149
      %p151 = pneg %p35
      %p152 = pneg %p32
      %p153 = pneg %p56
      %p154 = pneg %p53
      %p155 = pneg %p77
      %p156 = pneg %p74
      %p157 = pneg %p103
      %p158 = pneg %p100
      %s159 = smul.u32 16, %s14
      %p160 = scmp.lt.s32.totalorder %s159, 31
      %s161 = scalar_select %p160, %s159, 31
      %s162 = smul.addr %s161, 8
      %s163 = scalar_lea.vmem %s3, %s162
      %s164 = smul.u32 16, %s14
      %p165 = scmp.lt.s32.totalorder %s164, 31
      %s166 = scalar_select %p165, %s164, 31
      %s167 = smul.addr %s166, 4
      %s168 = smul.addr %s167, 8
      %s169 = scalar_lea.vmem %s0, %s168
      %s170 = smul.u32 16, %s14
      %s171 = smul.u32 16, %s14
      %p172 = scmp.lt.s32.totalorder %s171, 31
      %s173 = scalar_select %p172, %s171, 31
      %s174 = smul.addr %s173, 8
      %s175 = scalar_lea.vmem %s3, %s174
      %s176 = smul.u32 16, %s14
      %v178 = vld [vmem:[%s169] sm:$0xff]
      %v179 = vld [vmem:[%s169 + $0x8] sm:$0xff]
      %v180 = vld [vmem:[%s169 + $0x10] sm:$0xff]
      %v181 = vld [vmem:[%s169 + $0x18] sm:$0xff]
      %v182 = vld [vmem:[%s169 + $0x20] sm:$0xff]
      %v183 = vld [vmem:[%s169 + $0x28] sm:$0xff]
      %v184 = vld [vmem:[%s169 + $0x30] sm:$0xff]
      %v185 = vld [vmem:[%s169 + $0x38] sm:$0xff]
      %v186 = vld [vmem:[%s169 + $0x40] sm:$0xff]
      %v187 = vld [vmem:[%s169 + $0x48] sm:$0xff]
      %v188 = vld [vmem:[%s169 + $0x50] sm:$0xff]
      %v189 = vld [vmem:[%s169 + $0x58] sm:$0xff]
      %v190 = vld [vmem:[%s169 + $0x60] sm:$0xff]
      %v191 = vld [vmem:[%s169 + $0x68] sm:$0xff]
      %v192 = vld [vmem:[%s169 + $0x70] sm:$0xff]
      %v193 = vld [vmem:[%s169 + $0x78] sm:$0xff]
      %v194 = vld [vmem:[%s169 + $0x80] sm:$0xff]
      %v195 = vld [vmem:[%s169 + $0x88] sm:$0xff]
      %v196 = vld [vmem:[%s169 + $0x90] sm:$0xff]
      %v197 = vld [vmem:[%s169 + $0x98] sm:$0xff]
      %v198 = vld [vmem:[%s169 + $0xa0] sm:$0xff]
      %v199 = vld [vmem:[%s169 + $0xa8] sm:$0xff]
      %v200 = vld [vmem:[%s169 + $0xb0] sm:$0xff]
      %v201 = vld [vmem:[%s169 + $0xb8] sm:$0xff]
      %v202 = vld [vmem:[%s169 + $0xc0] sm:$0xff]
      %v203 = vld [vmem:[%s169 + $0xc8] sm:$0xff]
      %v204 = vld [vmem:[%s169 + $0xd0] sm:$0xff]
      %v205 = vld [vmem:[%s169 + $0xd8] sm:$0xff]
      %v206 = vld [vmem:[%s169 + $0xe0] sm:$0xff]
      %v207 = vld [vmem:[%s169 + $0xe8] sm:$0xff]
      %v208 = vld [vmem:[%s169 + $0xf0] sm:$0xff]
      %v209 = vld [vmem:[%s169 + $0xf8] sm:$0xff]
      %v210 = vld [vmem:[%s169 + $0x100] sm:$0xff]
      %v211 = vld [vmem:[%s169 + $0x108] sm:$0xff]
      %v212 = vld [vmem:[%s169 + $0x110] sm:$0xff]
      %v213 = vld [vmem:[%s169 + $0x118] sm:$0xff]
      %v214 = vld [vmem:[%s169 + $0x120] sm:$0xff]
      %v215 = vld [vmem:[%s169 + $0x128] sm:$0xff]
      %v216 = vld [vmem:[%s169 + $0x130] sm:$0xff]
      %v217 = vld [vmem:[%s169 + $0x138] sm:$0xff]
      %v218 = vld [vmem:[%s169 + $0x140] sm:$0xff]
      %v219 = vld [vmem:[%s169 + $0x148] sm:$0xff]
      %v220 = vld [vmem:[%s169 + $0x150] sm:$0xff]
      %v221 = vld [vmem:[%s169 + $0x158] sm:$0xff]
      %v222 = vld [vmem:[%s169 + $0x160] sm:$0xff]
      %v223 = vld [vmem:[%s169 + $0x168] sm:$0xff]
      %v224 = vld [vmem:[%s169 + $0x170] sm:$0xff]
      %v225 = vld [vmem:[%s169 + $0x178] sm:$0xff]
      %v226 = vld [vmem:[%s169 + $0x180] sm:$0xff]
      %v227 = vld [vmem:[%s169 + $0x188] sm:$0xff]
      %v228 = vld [vmem:[%s169 + $0x190] sm:$0xff]
      %v229 = vld [vmem:[%s169 + $0x198] sm:$0xff]
      %v230 = vld [vmem:[%s169 + $0x1a0] sm:$0xff]
      %v231 = vld [vmem:[%s169 + $0x1a8] sm:$0xff]
      %v232 = vld [vmem:[%s169 + $0x1b0] sm:$0xff]
      %v233 = vld [vmem:[%s169 + $0x1b8] sm:$0xff]
      %v234 = vld [vmem:[%s169 + $0x1c0] sm:$0xff]
      %v235 = vld [vmem:[%s169 + $0x1c8] sm:$0xff]
      %v236 = vld [vmem:[%s169 + $0x1d0] sm:$0xff]
      %v237 = vld [vmem:[%s169 + $0x1d8] sm:$0xff]
      %v238 = vld [vmem:[%s169 + $0x1e0] sm:$0xff]
      %v239 = vld [vmem:[%s169 + $0x1e8] sm:$0xff]
      %v240 = vld [vmem:[%s169 + $0x1f0] sm:$0xff]
      %v241 = vld [vmem:[%s169 + $0x1f8] sm:$0xff]
      %v242 = vcvt.f32.s32.to.zero.pseudo %v178
      %v243 = vcvt.f32.s32.to.zero.pseudo %v179
      %v244 = vcvt.f32.s32.to.zero.pseudo %v180
      %v245 = vcvt.f32.s32.to.zero.pseudo %v181
      %v246 = vcvt.f32.s32.to.zero.pseudo %v182
      %v247 = vcvt.f32.s32.to.zero.pseudo %v183
      %v248 = vcvt.f32.s32.to.zero.pseudo %v184
      %v249 = vcvt.f32.s32.to.zero.pseudo %v185
      %v250 = vcvt.f32.s32.to.zero.pseudo %v186
      %v251 = vcvt.f32.s32.to.zero.pseudo %v187
      %v252 = vcvt.f32.s32.to.zero.pseudo %v188
      %v253 = vcvt.f32.s32.to.zero.pseudo %v189
      %v254 = vcvt.f32.s32.to.zero.pseudo %v190
      %v255 = vcvt.f32.s32.to.zero.pseudo %v191
      %v256 = vcvt.f32.s32.to.zero.pseudo %v192
      %v257 = vcvt.f32.s32.to.zero.pseudo %v193
      %v258 = vcvt.f32.s32.to.zero.pseudo %v194
      %v259 = vcvt.f32.s32.to.zero.pseudo %v195
      %v260 = vcvt.f32.s32.to.zero.pseudo %v196
      %v261 = vcvt.f32.s32.to.zero.pseudo %v197
      %v262 = vcvt.f32.s32.to.zero.pseudo %v198
      %v263 = vcvt.f32.s32.to.zero.pseudo %v199
      %v264 = vcvt.f32.s32.to.zero.pseudo %v200
      %v265 = vcvt.f32.s32.to.zero.pseudo %v201
      %v266 = vcvt.f32.s32.to.zero.pseudo %v202
      %v267 = vcvt.f32.s32.to.zero.pseudo %v203
      %v268 = vcvt.f32.s32.to.zero.pseudo %v204
      %v269 = vcvt.f32.s32.to.zero.pseudo %v205
      %v270 = vcvt.f32.s32.to.zero.pseudo %v206
      %v271 = vcvt.f32.s32.to.zero.pseudo %v207
      %v272 = vcvt.f32.s32.to.zero.pseudo %v208
      %v273 = vcvt.f32.s32.to.zero.pseudo %v209
      %v274 = vcvt.f32.s32.to.zero.pseudo %v210
      %v275 = vcvt.f32.s32.to.zero.pseudo %v211
      %v276 = vcvt.f32.s32.to.zero.pseudo %v212
      %v277 = vcvt.f32.s32.to.zero.pseudo %v213
      %v278 = vcvt.f32.s32.to.zero.pseudo %v214
      %v279 = vcvt.f32.s32.to.zero.pseudo %v215
      %v280 = vcvt.f32.s32.to.zero.pseudo %v216
      %v281 = vcvt.f32.s32.to.zero.pseudo %v217
      %v282 = vcvt.f32.s32.to.zero.pseudo %v218
      %v283 = vcvt.f32.s32.to.zero.pseudo %v219
      %v284 = vcvt.f32.s32.to.zero.pseudo %v220
      %v285 = vcvt.f32.s32.to.zero.pseudo %v221
      %v286 = vcvt.f32.s32.to.zero.pseudo %v222
      %v287 = vcvt.f32.s32.to.zero.pseudo %v223
      %v288 = vcvt.f32.s32.to.zero.pseudo %v224
      %v289 = vcvt.f32.s32.to.zero.pseudo %v225
      %v290 = vcvt.f32.s32.to.zero.pseudo %v226
      %v291 = vcvt.f32.s32.to.zero.pseudo %v227
      %v292 = vcvt.f32.s32.to.zero.pseudo %v228
      %v293 = vcvt.f32.s32.to.zero.pseudo %v229
      %v294 = vcvt.f32.s32.to.zero.pseudo %v230
      %v295 = vcvt.f32.s32.to.zero.pseudo %v231
      %v296 = vcvt.f32.s32.to.zero.pseudo %v232
      %v297 = vcvt.f32.s32.to.zero.pseudo %v233
      %v298 = vcvt.f32.s32.to.zero.pseudo %v234
      %v299 = vcvt.f32.s32.to.zero.pseudo %v235
      %v300 = vcvt.f32.s32.to.zero.pseudo %v236
      %v301 = vcvt.f32.s32.to.zero.pseudo %v237
      %v302 = vcvt.f32.s32.to.zero.pseudo %v238
      %v303 = vcvt.f32.s32.to.zero.pseudo %v239
      %v304 = vcvt.f32.s32.to.zero.pseudo %v240
      %v305 = vcvt.f32.s32.to.zero.pseudo %v241
      %v306 = vpack.c.b16 %v246, %v242
      %v307 = vpack.c.b16 %v254, %v250
      %v308 = vpack.c.b8 %v307, %v306
      %v309 = vpack.c.b16 %v247, %v243
      %v310 = vpack.c.b16 %v255, %v251
      %v311 = vpack.c.b8 %v310, %v309
      %v312 = vpack.c.b16 %v248, %v244
      %v313 = vpack.c.b16 %v256, %v252
      %v314 = vpack.c.b8 %v313, %v312
      %v315 = vpack.c.b16 %v249, %v245
      %v316 = vpack.c.b16 %v257, %v253
      %v317 = vpack.c.b8 %v316, %v315
      %v318 = vpack.c.b16 %v262, %v258
      %v319 = vpack.c.b16 %v270, %v266
      %v320 = vpack.c.b8 %v319, %v318
      %v321 = vpack.c.b16 %v263, %v259
      %v322 = vpack.c.b16 %v271, %v267
      %v323 = vpack.c.b8 %v322, %v321
      %v324 = vpack.c.b16 %v264, %v260
      %v325 = vpack.c.b16 %v272, %v268
      %v326 = vpack.c.b8 %v325, %v324
      %v327 = vpack.c.b16 %v265, %v261
      %v328 = vpack.c.b16 %v273, %v269
      %v329 = vpack.c.b8 %v328, %v327
      %v330 = vpack.c.b16 %v278, %v274
      %v331 = vpack.c.b16 %v286, %v282
      %v332 = vpack.c.b8 %v331, %v330
      %v333 = vpack.c.b16 %v279, %v275
      %v334 = vpack.c.b16 %v287, %v283
      %v335 = vpack.c.b8 %v334, %v333
      %v336 = vpack.c.b16 %v280, %v276
      %v337 = vpack.c.b16 %v288, %v284
      %v338 = vpack.c.b8 %v337, %v336
      %v339 = vpack.c.b16 %v281, %v277
      %v340 = vpack.c.b16 %v289, %v285
      %v341 = vpack.c.b8 %v340, %v339
      %v342 = vpack.c.b16 %v294, %v290
      %v343 = vpack.c.b16 %v302, %v298
      %v344 = vpack.c.b8 %v343, %v342
      %v345 = vpack.c.b16 %v295, %v291
      %v346 = vpack.c.b16 %v303, %v299
      %v347 = vpack.c.b8 %v346, %v345
      %v348 = vpack.c.b16 %v296, %v292
      %v349 = vpack.c.b16 %v304, %v300
      %v350 = vpack.c.b8 %v349, %v348
      %v351 = vpack.c.b16 %v297, %v293
      %v352 = vpack.c.b16 %v305, %v301
      %v353 = vpack.c.b8 %v352, %v351
      %v354 = vunpack.c.l.s8.bf16 %v308
      %v355 = vunpack.c.l.s8.bf16 %v311
      %v356 = vunpack.c.l.s8.bf16 %v314
      %v357 = vunpack.c.l.s8.bf16 %v317
      %v358 = vunpack.c.h.s8.bf16 %v308
      %v359 = vunpack.c.h.s8.bf16 %v311
      %v360 = vunpack.c.h.s8.bf16 %v314
      %v361 = vunpack.c.h.s8.bf16 %v317
      %v362 = vunpack.c.l.s8.bf16 %v320
      %v363 = vunpack.c.l.s8.bf16 %v323
      %v364 = vunpack.c.l.s8.bf16 %v326
      %v365 = vunpack.c.l.s8.bf16 %v329
      %v366 = vunpack.c.h.s8.bf16 %v320
      %v367 = vunpack.c.h.s8.bf16 %v323
      %v368 = vunpack.c.h.s8.bf16 %v326
      %v369 = vunpack.c.h.s8.bf16 %v329
      %v370 = vunpack.c.l.s8.bf16 %v332
      %v371 = vunpack.c.l.s8.bf16 %v335
      %v372 = vunpack.c.l.s8.bf16 %v338
      %v373 = vunpack.c.l.s8.bf16 %v341
      %v374 = vunpack.c.h.s8.bf16 %v332
      %v375 = vunpack.c.h.s8.bf16 %v335
      %v376 = vunpack.c.h.s8.bf16 %v338
      %v377 = vunpack.c.h.s8.bf16 %v341
      %v378 = vunpack.c.l.s8.bf16 %v344
      %v379 = vunpack.c.l.s8.bf16 %v347
      %v380 = vunpack.c.l.s8.bf16 %v350
      %v381 = vunpack.c.l.s8.bf16 %v353
      %v382 = vunpack.c.h.s8.bf16 %v344
      %v383 = vunpack.c.h.s8.bf16 %v347
      %v384 = vunpack.c.h.s8.bf16 %v350
      %v385 = vunpack.c.h.s8.bf16 %v353
      %v386 = vld [vmem:[%s1] sm:$0xf]
      %v387 = vld [vmem:[%s1 + $0x4] sm:$0xf]
      %v388 = vld [vmem:[%s1 + $0x8] sm:$0xf]
      %v389 = vld [vmem:[%s1 + $0xc] sm:$0xf]
      %v390 = vld [vmem:[%s1 + $0x10] sm:$0xf]
      %v391 = vld [vmem:[%s1 + $0x14] sm:$0xf]
      %v392 = vld [vmem:[%s1 + $0x18] sm:$0xf]
      %v393 = vld [vmem:[%s1 + $0x1c] sm:$0xf]
      %v394 = vld [vmem:[%s1 + $0x20] sm:$0xf]
      %v395 = vld [vmem:[%s1 + $0x24] sm:$0xf]
      %v396 = vld [vmem:[%s1 + $0x28] sm:$0xf]
      %v397 = vld [vmem:[%s1 + $0x2c] sm:$0xf]
      %v398 = vld [vmem:[%s1 + $0x30] sm:$0xf]
      %v399 = vld [vmem:[%s1 + $0x34] sm:$0xf]
      %v400 = vld [vmem:[%s1 + $0x38] sm:$0xf]
      %v401 = vld [vmem:[%s1 + $0x3c] sm:$0xf]
      %v402 = vld [vmem:[%s1 + $0x40] sm:$0xf]
      %v403 = vld [vmem:[%s1 + $0x44] sm:$0xf]
      %v404 = vld [vmem:[%s1 + $0x48] sm:$0xf]
      %v405 = vld [vmem:[%s1 + $0x4c] sm:$0xf]
      %v406 = vld [vmem:[%s1 + $0x50] sm:$0xf]
      %v407 = vld [vmem:[%s1 + $0x54] sm:$0xf]
      %v408 = vld [vmem:[%s1 + $0x58] sm:$0xf]
      %v409 = vld [vmem:[%s1 + $0x5c] sm:$0xf]
      %v410 = vld [vmem:[%s1 + $0x60] sm:$0xf]
      %v411 = vld [vmem:[%s1 + $0x64] sm:$0xf]
      %v412 = vld [vmem:[%s1 + $0x68] sm:$0xf]
      %v413 = vld [vmem:[%s1 + $0x6c] sm:$0xf]
      %v414 = vld [vmem:[%s1 + $0x70] sm:$0xf]
      %v415 = vld [vmem:[%s1 + $0x74] sm:$0xf]
      %v416 = vld [vmem:[%s1 + $0x78] sm:$0xf]
      %v417 = vld [vmem:[%s1 + $0x7c] sm:$0xf]
      %v418 = vld [vmem:[%s1 + $0x80] sm:$0xf]
      %v419 = vld [vmem:[%s1 + $0x84] sm:$0xf]
      %v420 = vld [vmem:[%s1 + $0x88] sm:$0xf]
      %v421 = vld [vmem:[%s1 + $0x8c] sm:$0xf]
      %v422 = vld [vmem:[%s1 + $0x90] sm:$0xf]
      %v423 = vld [vmem:[%s1 + $0x94] sm:$0xf]
      %v424 = vld [vmem:[%s1 + $0x98] sm:$0xf]
      %v425 = vld [vmem:[%s1 + $0x9c] sm:$0xf]
      %v426 = vld [vmem:[%s1 + $0xa0] sm:$0xf]
      %v427 = vld [vmem:[%s1 + $0xa4] sm:$0xf]
      %v428 = vld [vmem:[%s1 + $0xa8] sm:$0xf]
      %v429 = vld [vmem:[%s1 + $0xac] sm:$0xf]
      %v430 = vld [vmem:[%s1 + $0xb0] sm:$0xf]
      %v431 = vld [vmem:[%s1 + $0xb4] sm:$0xf]
      %v432 = vld [vmem:[%s1 + $0xb8] sm:$0xf]
      %v433 = vld [vmem:[%s1 + $0xbc] sm:$0xf]
      %v434 = vld [vmem:[%s1 + $0xc0] sm:$0xf]
      %v435 = vld [vmem:[%s1 + $0xc4] sm:$0xf]
      %v436 = vld [vmem:[%s1 + $0xc8] sm:$0xf]
      %v437 = vld [vmem:[%s1 + $0xcc] sm:$0xf]
      %v438 = vld [vmem:[%s1 + $0xd0] sm:$0xf]
      %v439 = vld [vmem:[%s1 + $0xd4] sm:$0xf]
      %v440 = vld [vmem:[%s1 + $0xd8] sm:$0xf]
      %v441 = vld [vmem:[%s1 + $0xdc] sm:$0xf]
      %v442 = vld [vmem:[%s1 + $0xe0] sm:$0xf]
      %v443 = vld [vmem:[%s1 + $0xe4] sm:$0xf]
      %v444 = vld [vmem:[%s1 + $0xe8] sm:$0xf]
      %v445 = vld [vmem:[%s1 + $0xec] sm:$0xf]
      %v506 = vunpack.c.l.b16 %v386
      %v507 = vunpack.c.l.b16 %v387
      %v508 = vunpack.c.l.b16 %v388
      %v509 = vunpack.c.l.b16 %v389
      %v510 = vunpack.c.l.b16 %v390
      %v511 = vunpack.c.l.b16 %v391
      %v512 = vunpack.c.l.b16 %v392
      %v513 = vunpack.c.l.b16 %v393
      %v514 = vunpack.c.l.b16 %v394
      %v515 = vunpack.c.l.b16 %v395
      %v516 = vunpack.c.l.b16 %v396
      %v517 = vunpack.c.l.b16 %v397
      %v518 = vunpack.c.l.b16 %v398
      %v519 = vunpack.c.l.b16 %v399
      %v520 = vunpack.c.l.b16 %v400
      %v521 = vunpack.c.l.b16 %v401
      %v522 = vunpack.c.l.b16 %v402
      %v523 = vunpack.c.l.b16 %v403
      %v524 = vunpack.c.l.b16 %v404
      %v525 = vunpack.c.l.b16 %v405
      %v526 = vunpack.c.l.b16 %v406
      %v527 = vunpack.c.l.b16 %v407
      %v528 = vunpack.c.l.b16 %v408
      %v529 = vunpack.c.l.b16 %v409
      %v530 = vunpack.c.l.b16 %v410
      %v531 = vunpack.c.l.b16 %v411
      %v532 = vunpack.c.l.b16 %v412
      %v533 = vunpack.c.l.b16 %v413
      %v534 = vunpack.c.l.b16 %v414
      %v535 = vunpack.c.l.b16 %v415
      %v536 = vunpack.c.l.b16 %v416
      %v537 = vunpack.c.l.b16 %v417
      %v538 = vunpack.c.l.b16 %v418
      %v539 = vunpack.c.l.b16 %v419
      %v540 = vunpack.c.l.b16 %v420
      %v541 = vunpack.c.l.b16 %v421
      %v542 = vunpack.c.l.b16 %v422
      %v543 = vunpack.c.l.b16 %v423
      %v544 = vunpack.c.l.b16 %v424
      %v545 = vunpack.c.l.b16 %v425
      %v546 = vunpack.c.l.b16 %v426
      %v547 = vunpack.c.l.b16 %v427
      %v548 = vunpack.c.l.b16 %v428
      %v549 = vunpack.c.l.b16 %v429
      %v550 = vunpack.c.l.b16 %v430
      %v551 = vunpack.c.l.b16 %v431
      %v552 = vunpack.c.l.b16 %v432
      %v553 = vunpack.c.l.b16 %v433
      %v554 = vunpack.c.l.b16 %v434
      %v555 = vunpack.c.l.b16 %v435
      %v556 = vunpack.c.l.b16 %v436
      %v557 = vunpack.c.l.b16 %v437
      %v558 = vunpack.c.l.b16 %v438
      %v559 = vunpack.c.l.b16 %v439
      %v560 = vunpack.c.l.b16 %v440
      %v561 = vunpack.c.l.b16 %v441
      %v562 = vunpack.c.l.b16 %v442
      %v563 = vunpack.c.l.b16 %v443
      %v564 = vunpack.c.l.b16 %v444
      %v565 = vunpack.c.l.b16 %v445
      %v566 = vpack.c.b16 %v507, %v506
      %v567 = vpack.c.b16 %v509, %v508
      %v568 = vpack.c.b16 %v511, %v510
      %v569 = vpack.c.b16 %v513, %v512
      %v570 = vpack.c.b16 %v515, %v514
      %v571 = vpack.c.b16 %v517, %v516
      %v572 = vpack.c.b16 %v519, %v518
      %v573 = vpack.c.b16 %v521, %v520
      %v574 = vpack.c.b16 %v523, %v522
      %v575 = vpack.c.b16 %v525, %v524
      %v576 = vpack.c.b16 %v527, %v526
      %v577 = vpack.c.b16 %v529, %v528
      %v578 = vpack.c.b16 %v531, %v530
      %v579 = vpack.c.b16 %v533, %v532
      %v580 = vpack.c.b16 %v535, %v534
      %v581 = vpack.c.b16 %v537, %v536
      %v582 = vpack.c.b16 %v539, %v538
      %v583 = vpack.c.b16 %v541, %v540
      %v584 = vpack.c.b16 %v543, %v542
      %v585 = vpack.c.b16 %v545, %v544
      %v586 = vpack.c.b16 %v547, %v546
      %v587 = vpack.c.b16 %v549, %v548
      %v588 = vpack.c.b16 %v551, %v550
      %v589 = vpack.c.b16 %v553, %v552
      %v590 = vpack.c.b16 %v555, %v554
      %v591 = vpack.c.b16 %v557, %v556
      %v592 = vpack.c.b16 %v559, %v558
      %v593 = vpack.c.b16 %v561, %v560
      %v594 = vpack.c.b16 %v563, %v562
      %v595 = vpack.c.b16 %v565, %v564
      %vm626 = vcmask 785408
      %v628 = vsel %vm626, %v357, 0
      %v631 = vsel %vm626, %v361, 0
      %v634 = vsel %vm626, %v365, 0
      %v637 = vsel %vm626, %v369, 0
      %v640 = vsel %vm626, %v373, 0
      %v643 = vsel %vm626, %v377, 0
      %v646 = vsel %vm626, %v381, 0
      %v649 = vsel %vm626, %v385, 0
      %651 = vmatprep.subr.bf16.mxu0 0
      %652 = vmatpush1.bf16.msra.mxu0 %v566
      %653 = vmatprep.subr.bf16.mxu0 0
      %654 = vmatpush1.bf16.msra.mxu0 %v567
      %655 = vmatprep.subr.bf16.mxu0 0
      %656 = vmatpush1.bf16.msra.mxu0 %v568
      %657 = vmatprep.subr.bf16.mxu0 0
      %658 = vmatpush1.bf16.msra.mxu0 %v569
      %659 = vmatprep.subr.bf16.mxu0 0
      %660 = vmatpush1.bf16.msra.mxu0 %v570
      %661 = vmatprep.subr.bf16.mxu0 0
      %662 = vmatpush1.bf16.msra.mxu0 %v571
      %663 = vmatprep.subr.bf16.mxu0 0
      %664 = vmatpush1.bf16.msra.mxu0 %v572
      %665 = vmatprep.subr.bf16.mxu0 0
      %666 = vmatpush1.bf16.msra.mxu0 %v573
      %667 = vmatprep.subr.bf16.mxu0 0
      %668 = vmatpush1.bf16.msra.mxu0 %v574
      %669 = vmatprep.subr.bf16.mxu0 0
      %670 = vmatpush1.bf16.msra.mxu0 %v575
      %671 = vmatprep.subr.bf16.mxu0 0
      %672 = vmatpush1.bf16.msra.mxu0 %v576
      %673 = vmatprep.subr.bf16.mxu0 0
      %674 = vmatpush1.bf16.msra.mxu0 %v577
      %675 = vmatprep.subr.bf16.mxu0 0
      %676 = vmatpush1.bf16.msra.mxu0 %v578
      %677 = vmatprep.subr.bf16.mxu0 0
      %678 = vmatpush1.bf16.msra.mxu0 %v579
      %679 = vmatprep.subr.bf16.mxu0 0
      %680 = vmatpush1.bf16.msra.mxu0 %v580
      %681 = vmatprep.subr.bf16.mxu0 0
      %682 = vmatpush1.bf16.msra.mxu0 %v581
      %683 = vmatprep.mubr.bf16.mxu0 %v355
      %684 = vmatmul.mubr.bf16.gmra.mrb[0].mxu0 %v354
      %v685 = vpop.f32.mrb[0].mxu0
      %v686 = vadd.f32 0.0, %v685
      %v687 = vpop.f32.mrb[0].mxu0
      %v688 = vpop.f32.mrb[0].mxu0
      %v689 = vadd.f32 0.0, %v688
      %v690 = vpop.f32.mrb[0].mxu0
      %691 = vmatprep.mubr.bf16.mxu0 %v359
      %692 = vmatmul.mubr.bf16.gmra.mrb[0].mxu0 %v358
      %v693 = vpop.f32.mrb[0].mxu0
      %v694 = vadd.f32 0.0, %v693
      %v695 = vpop.f32.mrb[0].mxu0
      %v696 = vpop.f32.mrb[0].mxu0
      %v697 = vadd.f32 0.0, %v696
      %v698 = vpop.f32.mrb[0].mxu0
      %699 = vmatprep.mubr.bf16.mxu0 %v363
      %700 = vmatmul.mubr.bf16.gmra.mrb[0].mxu0 %v362
      %v701 = vpop.f32.mrb[0].mxu0
      %v702 = vadd.f32 0.0, %v701
      %v703 = vpop.f32.mrb[0].mxu0
      %v704 = vpop.f32.mrb[0].mxu0
      %v705 = vadd.f32 0.0, %v704
      %v706 = vpop.f32.mrb[0].mxu0
      %707 = vmatprep.mubr.bf16.mxu0 %v367
      %708 = vmatmul.mubr.bf16.gmra.mrb[0].mxu0 %v366
      %v709 = vpop.f32.mrb[0].mxu0
      %v710 = vadd.f32 0.0, %v709
      %v711 = vpop.f32.mrb[0].mxu0
      %v712 = vpop.f32.mrb[0].mxu0
      %v713 = vadd.f32 0.0, %v712
      %v714 = vpop.f32.mrb[0].mxu0
      %715 = vmatprep.mubr.bf16.mxu0 %v371
      %716 = vmatmul.mubr.bf16.gmra.mrb[0].mxu0 %v370
      %v717 = vpop.f32.mrb[0].mxu0
      %v718 = vadd.f32 0.0, %v717
      %v719 = vpop.f32.mrb[0].mxu0
      %v720 = vpop.f32.mrb[0].mxu0
      %v721 = vadd.f32 0.0, %v720
      %v722 = vpop.f32.mrb[0].mxu0
      %723 = vmatprep.mubr.bf16.mxu0 %v375
      %724 = vmatmul.mubr.bf16.gmra.mrb[0].mxu0 %v374
      %v725 = vpop.f32.mrb[0].mxu0
      %v726 = vadd.f32 0.0, %v725
      %v727 = vpop.f32.mrb[0].mxu0
      %v728 = vpop.f32.mrb[0].mxu0
      %v729 = vadd.f32 0.0, %v728
      %v730 = vpop.f32.mrb[0].mxu0
      %731 = vmatprep.mubr.bf16.mxu0 %v379
      %732 = vmatmul.mubr.bf16.gmra.mrb[0].mxu0 %v378
      %v733 = vpop.f32.mrb[0].mxu0
      %v734 = vadd.f32 0.0, %v733
      %v735 = vpop.f32.mrb[0].mxu0
      %v736 = vpop.f32.mrb[0].mxu0
      %v737 = vadd.f32 0.0, %v736
      %v738 = vpop.f32.mrb[0].mxu0
      %739 = vmatprep.mubr.bf16.mxu0 %v383
      %740 = vmatmul.mubr.bf16.gmra.mrb[0].mxu0 %v382
      %v741 = vpop.f32.mrb[0].mxu0
      %v742 = vadd.f32 0.0, %v741
      %v743 = vpop.f32.mrb[0].mxu0
      %v744 = vpop.f32.mrb[0].mxu0
      %v745 = vadd.f32 0.0, %v744
      %v746 = vpop.f32.mrb[0].mxu0
      %747 = vdwg.mxu0
      %748 = vmatprep.subr.bf16.mxu0 0
      %749 = vmatpush1.bf16.msra.mxu0 %v582
      %750 = vmatprep.subr.bf16.mxu0 0
      %751 = vmatpush1.bf16.msra.mxu0 %v583
      %752 = vmatprep.subr.bf16.mxu0 0
      %753 = vmatpush1.bf16.msra.mxu0 %v584
      %754 = vmatprep.subr.bf16.mxu0 0
      %755 = vmatpush1.bf16.msra.mxu0 %v585
      %756 = vmatprep.subr.bf16.mxu0 0
      %757 = vmatpush1.bf16.msra.mxu0 %v586
      %758 = vmatprep.subr.bf16.mxu0 0
      %759 = vmatpush1.bf16.msra.mxu0 %v587
      %760 = vmatprep.subr.bf16.mxu0 0
      %761 = vmatpush1.bf16.msra.mxu0 %v588
      %762 = vmatprep.subr.bf16.mxu0 0
      %763 = vmatpush1.bf16.msra.mxu0 %v589
      %764 = vmatprep.subr.bf16.mxu0 0
      %765 = vmatpush1.bf16.msra.mxu0 %v590
      %766 = vmatprep.subr.bf16.mxu0 0
      %767 = vmatpush1.bf16.msra.mxu0 %v591
      %768 = vmatprep.subr.bf16.mxu0 0
      %769 = vmatpush1.bf16.msra.mxu0 %v592
      %770 = vmatprep.subr.bf16.mxu0 0
      %771 = vmatpush1.bf16.msra.mxu0 %v593
      %772 = vmatprep.subr.bf16.mxu0 0
      %773 = vmatpush1.bf16.msra.mxu0 %v594
      %774 = vmatprep.subr.bf16.mxu0 0
      %775 = vmatpush1.bf16.msra.mxu0 %v595
      %776 = vmatprep.subr.bf16.mxu0 0
      %777 = vmatpush1.bf16.msra.mxu0 0
      %778 = vmatprep.subr.bf16.mxu0 0
      %779 = vmatpush1.bf16.msra.mxu0 0
      %780 = vmatprep.mubr.bf16.mxu0 %v628
      %781 = vmatmul.mubr.bf16.gmra.mrb[0].mxu0 %v356
      %v782 = vpop.f32.mrb[0].mxu0
      %v783 = vadd.f32 %v686, %v782
      %v784 = vpop.f32.mrb[0].mxu0
      %v785 = vpop.f32.mrb[0].mxu0
      %v786 = vadd.f32 %v689, %v785
      %v787 = vpop.f32.mrb[0].mxu0
      %788 = vmatprep.mubr.bf16.mxu0 %v631
      %789 = vmatmul.mubr.bf16.gmra.mrb[0].mxu0 %v360
      %v790 = vpop.f32.mrb[0].mxu0
      %v791 = vadd.f32 %v694, %v790
      %v792 = vpop.f32.mrb[0].mxu0
      %v793 = vpop.f32.mrb[0].mxu0
      %v794 = vadd.f32 %v697, %v793
      %v795 = vpop.f32.mrb[0].mxu0
      %796 = vmatprep.mubr.bf16.mxu0 %v634
      %797 = vmatmul.mubr.bf16.gmra.mrb[0].mxu0 %v364
      %v798 = vpop.f32.mrb[0].mxu0
      %v799 = vadd.f32 %v702, %v798
      %v800 = vpop.f32.mrb[0].mxu0
      %v801 = vpop.f32.mrb[0].mxu0
      %v802 = vadd.f32 %v705, %v801
      %v803 = vpop.f32.mrb[0].mxu0
      %804 = vmatprep.mubr.bf16.mxu0 %v637
      %805 = vmatmul.mubr.bf16.gmra.mrb[0].mxu0 %v368
      %v806 = vpop.f32.mrb[0].mxu0
      %v807 = vadd.f32 %v710, %v806
      %v808 = vpop.f32.mrb[0].mxu0
      %v809 = vpop.f32.mrb[0].mxu0
      %v810 = vadd.f32 %v713, %v809
      %v811 = vpop.f32.mrb[0].mxu0
      %812 = vmatprep.mubr.bf16.mxu0 %v640
      %813 = vmatmul.mubr.bf16.gmra.mrb[0].mxu0 %v372
      %v814 = vpop.f32.mrb[0].mxu0
      %v815 = vadd.f32 %v718, %v814
      %v816 = vpop.f32.mrb[0].mxu0
      %v817 = vpop.f32.mrb[0].mxu0
      %v818 = vadd.f32 %v721, %v817
      %v819 = vpop.f32.mrb[0].mxu0
      %820 = vmatprep.mubr.bf16.mxu0 %v643
      %821 = vmatmul.mubr.bf16.gmra.mrb[0].mxu0 %v376
      %v822 = vpop.f32.mrb[0].mxu0
      %v823 = vadd.f32 %v726, %v822
      %v824 = vpop.f32.mrb[0].mxu0
      %v825 = vpop.f32.mrb[0].mxu0
      %v826 = vadd.f32 %v729, %v825
      %v827 = vpop.f32.mrb[0].mxu0
      %828 = vmatprep.mubr.bf16.mxu0 %v646
      %829 = vmatmul.mubr.bf16.gmra.mrb[0].mxu0 %v380
      %v830 = vpop.f32.mrb[0].mxu0
      %v831 = vadd.f32 %v734, %v830
      %v832 = vpop.f32.mrb[0].mxu0
      %v833 = vpop.f32.mrb[0].mxu0
      %v834 = vadd.f32 %v737, %v833
      %v835 = vpop.f32.mrb[0].mxu0
      %836 = vmatprep.mubr.bf16.mxu0 %v649
      %837 = vmatmul.mubr.bf16.gmra.mrb[0].mxu0 %v384
      %v838 = vpop.f32.mrb[0].mxu0
      %v839 = vadd.f32 %v742, %v838
      %v840 = vpop.f32.mrb[0].mxu0
      %v841 = vpop.f32.mrb[0].mxu0
      %v842 = vadd.f32 %v745, %v841
      %v843 = vpop.f32.mrb[0].mxu0
      %844 = vdwg.mxu0
      %v845 = vld [vmem:[%s2] sm:$0x1]
      %v847 = vlaneseq
      %v848 = vshrl.u32 %v847, 7
      %v849 = vsub.s32 0, %v848
      %v850 = vrot.slane %v845, %v849
      %v852 = vmul.f32 %v783, %v850
      %v853 = vmul.f32 %v786, %v850
      %v854 = vmul.f32 %v791, %v850
      %v855 = vmul.f32 %v794, %v850
      %v856 = vmul.f32 %v799, %v850
      %v857 = vmul.f32 %v802, %v850
      %v858 = vmul.f32 %v807, %v850
      %v859 = vmul.f32 %v810, %v850
      %v860 = vmul.f32 %v815, %v850
      %v861 = vmul.f32 %v818, %v850
      %v862 = vmul.f32 %v823, %v850
      %v863 = vmul.f32 %v826, %v850
      %v864 = vmul.f32 %v831, %v850
      %v865 = vmul.f32 %v834, %v850
      %v866 = vmul.f32 %v839, %v850
      %v867 = vmul.f32 %v842, %v850
      %868 = vst [vmem:[%s175] sm:$0xff] %v852
      %869 = vst [vmem:[%s175 + $0x8] sm:$0xff] %v853
      %870 = vst [vmem:[%s175 + $0x10] sm:$0xff] %v854
      %871 = vst [vmem:[%s175 + $0x18] sm:$0xff] %v855
      %872 = vst [vmem:[%s175 + $0x20] sm:$0xff] %v856
      %873 = vst [vmem:[%s175 + $0x28] sm:$0xff] %v857
      %874 = vst [vmem:[%s175 + $0x30] sm:$0xff] %v858
      %875 = vst [vmem:[%s175 + $0x38] sm:$0xff] %v859
      %876 = vst [vmem:[%s175 + $0x40] sm:$0xff] %v860
      %877 = vst [vmem:[%s175 + $0x48] sm:$0xff] %v861
      %878 = vst [vmem:[%s175 + $0x50] sm:$0xff] %v862
      %879 = vst [vmem:[%s175 + $0x58] sm:$0xff] %v863
      %880 = vst [vmem:[%s175 + $0x60] sm:$0xff] %v864
      %881 = vst [vmem:[%s175 + $0x68] sm:$0xff] %v865
      %882 = vst [vmem:[%s175 + $0x70] sm:$0xff] %v866
      %883 = vst [vmem:[%s175 + $0x78] sm:$0xff] %v867
      %s884 = smul.u32 16, %s14
      %p885 = scmp.lt.s32.totalorder %s884, 31
      %s886 = scalar_select %p885, %s884, 31
      %s887 = smul.addr %s886, 8
      %s888 = scalar_lea.vmem %s3, %s887
      // Predicated region
      $region33: #{adaptive_avg_pool3d_int8.1} parent=31 // pred_check
        %p889 = pneg %p100
      $region34: #{adaptive_avg_pool3d_int8.1} parent=31 // pred_check_branch
        %891 = sbr.rel (%p889) target = $region36
      $region35: #{adaptive_avg_pool3d_int8.1} parent=31 // pred_region
        %s892 = smul.u32 16, %s14
      $region36: #{adaptive_avg_pool3d_int8.1} parent=31 // pred_fallthru
        _
    $region32: #{adaptive_avg_pool3d_int8.1} parent=5 // pred_fallthru
      _
    %p893 = scmp.le.s32.totalorder 2, %s9
    // Predicated region
    $region37: #{adaptive_avg_pool3d_int8.1} parent=5 // pred_check
      %p894 = pneg %p893
    $region38: #{adaptive_avg_pool3d_int8.1} parent=5 // pred_check_branch
      %896 = sbr.rel (%p894) target = $region40
    $region39: #{adaptive_avg_pool3d_int8.1} parent=5 // pred_region
      %s897 = ssub.s32 %s9, 2
      // Predicated region
      $region41: #{adaptive_avg_pool3d_int8.1} parent=39 // pred_check
        %p898 = pneg %p106
      $region42: #{adaptive_avg_pool3d_int8.1} parent=39 // pred_check_branch
        %900 = sbr.rel (%p898) target = $region44
      $region43: #{adaptive_avg_pool3d_int8.1} parent=39 // pred_region
        %s901 = smul.u32 16, %s15
        %p902 = scmp.lt.s32.totalorder %s901, 31
        %s903 = scalar_select %p902, %s901, 31
        %s904 = smul.addr %s903, 8
        %s905 = scalar_lea.vmem %s3, %s904
      $region44: #{adaptive_avg_pool3d_int8.1} parent=39 // pred_fallthru
        _
    $region40: #{adaptive_avg_pool3d_int8.1} parent=5 // pred_fallthru
      _
  $region6: #{adaptive_avg_pool3d_int8.1} parent=0 // loop_footer
    %s13 = sadd.s32 1, %s9
  $region7: #{adaptive_avg_pool3d_int8.1} parent=0 // loop_footer_branch
    %8 = sbr.rel target = $region3
  $region8: #{adaptive_avg_pool3d_int8.1} parent=0 // loop_exit
    _

</llo_original>
